<compile_context>
chip_gen: v5e
topology: v5e:2x2
jax: 0.10.0
libtpu: 0.0.40
codegen_flags: <defaults>
</compile_context>

<pallas_src>
import math

import jax
import jax.numpy as jnp
from jax.experimental import pallas as pl
from jax.experimental.pallas import tpu as pltpu

NB_JOINTS = 22          # HumanML3D skeleton used by the reference indices
REBA_IMPROVE = 0.5
PI = math.pi
EPS = 1e-7
NUM_PAIRS = 16          # 12 distinct angles + 4 duplicated rows (layout above)
TILE_T_MAX = 1024       # frame-tile width (lanes); multiple of 128
NEG_BIG = -3.4e38

# Abramowitz & Stegun 4.4.45 arccos coefficients (|err| < 2e-8 on [0, 1]).
_ACOS_COEFFS = (
    -0.0012624911, 0.0066700901, -0.0170881256, 0.0308918810,
    -0.0501743046, 0.0889789874, -0.2145988016, 1.5707963050,
)


def _acos(x):
    """arccos via polynomial (sqrt + mul/add only; Mosaic-friendly)."""
    ax = jnp.abs(x)
    p = jnp.full_like(ax, _ACOS_COEFFS[0])
    for c in _ACOS_COEFFS[1:]:
        p = p * ax + c
    r = jnp.sqrt(jnp.maximum(1.0 - ax, 0.0)) * p
    return jnp.where(x >= 0.0, r, PI - r)


def _per_row(row4, v_flex, v_rot, v_la, v_knee):
    """(8,1) per-row constant: rows cycle [flexion, rotation, lower-arm, knee]."""
    out = jnp.where(row4 == 0, v_flex,
                    jnp.where(row4 == 1, v_rot,
                              jnp.where(row4 == 2, v_la, v_knee)))
    return out.astype(jnp.float32)


def _ergo_loss_kernel(n_ref, va_ref, vb_ref, out_ref):
    tile_t = va_ref.shape[-1]

    # ---- packed angle pipeline: all 16 vector pairs at once ---------------
    ax = va_ref[0:NUM_PAIRS, :]
    ay = va_ref[NUM_PAIRS:2 * NUM_PAIRS, :]
    az = va_ref[2 * NUM_PAIRS:3 * NUM_PAIRS, :]
    bx = vb_ref[0:NUM_PAIRS, :]
    by = vb_ref[NUM_PAIRS:2 * NUM_PAIRS, :]
    bz = vb_ref[2 * NUM_PAIRS:3 * NUM_PAIRS, :]

    dot = ax * bx + ay * by + az * bz
    n1s = ax * ax + ay * ay + az * az
    n2s = bx * bx + by * by + bz * bz
    # cos = dot / (max(|v1|,eps)*max(|v2|,eps)) via one rsqrt (EUP), no divide.
    inv = jax.lax.rsqrt(jnp.maximum(n1s, EPS * EPS) *
                        jnp.maximum(n2s, EPS * EPS))
    cos_a = jnp.clip(dot * inv, -1.0 + EPS, 1.0 - EPS)
    ang = _acos(cos_a)
    ang = jnp.minimum(ang, PI - ang)       # matches reference anlge_3D fold
    deg = ang * (180.0 / PI)               # (16, tile_t)

    # Rows 0..7 vs 8..15 are the R / L halves (flexion/rotation duplicated),
    # so one aligned max yields rows:
    #   [flexion, rotation, lower_arm(max LR), knee(max LR)] x {pred, gt}
    angm = jnp.maximum(deg[0:8, :], deg[8:16, :])       # (8, tile_t)

    # ---- differentiable REBA thresholds (sigmoid = 0.5*tanh(0.5x)+0.5) ----
    # score_c = 1 + s(f-5)+s(f-20)+s(f-60) + s(r-20)+s(r-45)+s(r-90)
    #             + s(la-100)+s(60-la) + s(k-30)+s(k-60)
    row4 = jax.lax.broadcasted_iota(jnp.int32, (8, 1), 0) & 3
    b1 = _per_row(row4, -2.5, -10.0, -50.0, -15.0)      # thr  5 / 20 / 100 / 30
    a2 = _per_row(row4, 0.5, 0.5, -0.5, 0.5)            # sign of 2nd term
    b2 = _per_row(row4, -10.0, -22.5, 30.0, -30.0)      # thr 20 / 45 /  60 / 60
    b3 = _per_row(row4, -30.0, -45.0, 0.0, 0.0)         # thr 60 / 90 /  -- / --
    c3 = _per_row(row4, 0.5, 0.5, 0.0, 0.0)             # weight of 3rd term

    terms = (0.5 * jnp.tanh(0.5 * angm + b1) + 0.5
             + 0.5 * jnp.tanh(a2 * angm + b2) + 0.5
             + c3 * jnp.tanh(0.5 * angm + b3) + c3)     # (8, tile_t)

    pred_mask = (jax.lax.broadcasted_iota(jnp.int32, (8, 1), 0) < 4
                 ).astype(jnp.float32)
    score_pred = 1.0 + jnp.sum(terms * pred_mask, axis=0, keepdims=True)
    score_gt = 1.0 + jnp.sum(terms * (1.0 - pred_mask), axis=0, keepdims=True)

    # ---- loss + stats over valid frames of this tile ----------------------
    t0 = pl.program_id(0) * tile_t
    frame = jax.lax.broadcasted_iota(jnp.int32, (1, tile_t), 1) + t0
    valid = frame < n_ref[0]

    diff = score_pred - REBA_IMPROVE * score_gt
    leaky = jnp.where(diff >= 0.0, diff, 0.1 * diff)
    leaky = jnp.where(valid, leaky, 0.0)

    loss_part = jnp.sum(leaky, axis=1, keepdims=True)                    # (1,1)
    sum_part = jnp.sum(jnp.where(valid, score_pred, 0.0),
                       axis=1, keepdims=True)
    max_part = jnp.max(jnp.where(valid, score_pred, NEG_BIG),
                       axis=1, keepdims=True)

    # Single lane-dense (8,128) store: row0=loss, row1=sum, row2=max @ lane 0.
    row_o = jax.lax.broadcasted_iota(jnp.int32, (8, 128), 0)
    lane_o = jax.lax.broadcasted_iota(jnp.int32, (8, 128), 1)
    blk = jnp.where((row_o == 0) & (lane_o == 0), loss_part,
                    jnp.zeros((8, 128), jnp.float32))
    blk = jnp.where((row_o == 1) & (lane_o == 0), sum_part, blk)
    blk = jnp.where((row_o == 2) & (lane_o == 0), max_part, blk)
    out_ref[...] = blk


def _round_up(x, m):
    return ((x + m - 1) // m) * m


def _bone(x, a, b):
    return x[:, a, :] - x[:, b, :]


def _pack_rows(vec_list, t, tp):
    v = jnp.stack(vec_list, axis=0)                      # (16, T, 3)
    v = jnp.transpose(v, (2, 0, 1)).reshape(3 * NUM_PAIRS, t)
    v = v.astype(jnp.float32)
    return jnp.pad(v, ((0, 0), (0, tp - t)))             # (48, Tp)


@jax.jit
def ergo_loss(pred_xyz, gt_xyz):
    """pred_xyz, gt_xyz: (T, NB_JOINTS, 3) float32 recovered joint positions.

    Returns (loss, ave_REBA_score, max_REBA_score) matching the module's
    forward() output and its two side attributes.
    """
    T, J, _ = pred_xyz.shape
    assert J == NB_JOINTS

    tile_t = min(TILE_T_MAX, _round_up(T, 128))
    Tp = _round_up(T, tile_t)
    grid_t = Tp // tile_t

    p = pred_xyz.astype(jnp.float32)
    g = gt_xyz.astype(jnp.float32)
    y_up = jnp.broadcast_to(jnp.array([0.0, 1.0, 0.0], jnp.float32), (T, 3))

    # 16 (A, B) vector pairs; rows 8..15 mirror rows 0..7 with the left-side
    # limbs (flexion / rotation duplicated) so max(deg[0:8], deg[8:16]) gives
    # the L/R maxima with one aligned vreg op inside the kernel.
    a_vecs = [
        _bone(p, 12, 0), _bone(p, 16, 17), _bone(p, 21, 19), _bone(p, 5, 2),
        _bone(g, 12, 0), _bone(g, 16, 17), _bone(g, 21, 19), _bone(g, 5, 2),
        _bone(p, 12, 0), _bone(p, 16, 17), _bone(p, 20, 18), _bone(p, 4, 1),
        _bone(g, 12, 0), _bone(g, 16, 17), _bone(g, 20, 18), _bone(g, 4, 1),
    ]
    b_vecs = [
        y_up, _bone(p, 1, 2), _bone(p, 19, 17), _bone(p, 8, 5),
        y_up, _bone(g, 1, 2), _bone(g, 19, 17), _bone(g, 8, 5),
        y_up, _bone(p, 1, 2), _bone(p, 18, 16), _bone(p, 7, 4),
        y_up, _bone(g, 1, 2), _bone(g, 18, 16), _bone(g, 7, 4),
    ]

    va = _pack_rows(a_vecs, T, Tp)      # (48, Tp)
    vb = _pack_rows(b_vecs, T, Tp)      # (48, Tp)
    n_valid = jnp.array([T], dtype=jnp.int32)

    parts = pl.pallas_call(
        _ergo_loss_kernel,
        out_shape=jax.ShapeDtypeStruct((8 * grid_t, 128), jnp.float32),
        grid=(grid_t,),
        in_specs=[
            pl.BlockSpec(memory_space=pltpu.MemorySpace.SMEM),        # n_valid
            pl.BlockSpec((3 * NUM_PAIRS, tile_t), lambda t: (0, t)),  # A vecs
            pl.BlockSpec((3 * NUM_PAIRS, tile_t), lambda t: (0, t)),  # B vecs
        ],
        out_specs=pl.BlockSpec((8, 128), lambda t: (t, 0)),
        compiler_params=pltpu.CompilerParams(
            dimension_semantics=("parallel",)),
    )(n_valid, va, vb)

    parts = parts.reshape(grid_t, 8, 128)
    loss = jnp.sum(parts[:, 0, 0])
    ave = jnp.sum(parts[:, 1, 0]) / float(max(T, 1))
    mx = jnp.max(parts[:, 2, 0])
    return loss, ave, mx


if __name__ == "__main__":
    key = jax.random.PRNGKey(0)
    k1, k2 = jax.random.split(key)
    T = 8  # frames
    pred_xyz = jax.random.normal(k1, (T, NB_JOINTS, 3), dtype=jnp.float32)
    gt_xyz = jax.random.normal(k2, (T, NB_JOINTS, 3), dtype=jnp.float32)

    loss, ave_reba, max_reba = ergo_loss(pred_xyz, gt_xyz)
    jax.block_until_ready(loss)
    jax.block_until_ready(ave_reba)
    jax.block_until_ready(max_reba)
    print("KERNEL_OK")
</pallas_src>

<mosaic_0001>
module attributes {stable_mosaic.version = 11 : i64} {
  func.func @_ergo_loss_kernel(%arg0: i32, %arg1: memref<1xi32, #tpu.memory_space<smem>>, %arg2: memref<48x128xf32, #tpu.memory_space<vmem>>, %arg3: memref<48x128xf32, #tpu.memory_space<vmem>>, %arg4: memref<8x128xf32, #tpu.memory_space<vmem>>) attributes {dimension_semantics = [#tpu.dimension_semantics<parallel>], iteration_bounds = array<i64: 1>, scalar_prefetch = 0 : i64, scratch_operands = 0 : i64, tpu.core_type = #tpu.core_type<tc>, window_params = [{transform_indices = @transform_0, window_bounds = array<i64: 1>}, {transform_indices = @transform_1, window_bounds = array<i64: 48, 128>}, {transform_indices = @transform_2, window_bounds = array<i64: 48, 128>}, {transform_indices = @transform_3, window_bounds = array<i64: 8, 128>}]} {
    %c0 = arith.constant 0 : index
    %c0_0 = arith.constant 0 : index
    %0 = vector.load %arg2[%c0, %c0_0] : memref<48x128xf32, #tpu.memory_space<vmem>>, vector<16x128xf32>
    %c16 = arith.constant 16 : index
    %c0_1 = arith.constant 0 : index
    %1 = vector.load %arg2[%c16, %c0_1] : memref<48x128xf32, #tpu.memory_space<vmem>>, vector<16x128xf32>
    %c32 = arith.constant 32 : index
    %c0_2 = arith.constant 0 : index
    %2 = vector.load %arg2[%c32, %c0_2] : memref<48x128xf32, #tpu.memory_space<vmem>>, vector<16x128xf32>
    %c0_3 = arith.constant 0 : index
    %c0_4 = arith.constant 0 : index
    %3 = vector.load %arg3[%c0_3, %c0_4] : memref<48x128xf32, #tpu.memory_space<vmem>>, vector<16x128xf32>
    %c16_5 = arith.constant 16 : index
    %c0_6 = arith.constant 0 : index
    %4 = vector.load %arg3[%c16_5, %c0_6] : memref<48x128xf32, #tpu.memory_space<vmem>>, vector<16x128xf32>
    %c32_7 = arith.constant 32 : index
    %c0_8 = arith.constant 0 : index
    %5 = vector.load %arg3[%c32_7, %c0_8] : memref<48x128xf32, #tpu.memory_space<vmem>>, vector<16x128xf32>
    %6 = arith.mulf %0, %3 : vector<16x128xf32>
    %7 = arith.mulf %1, %4 : vector<16x128xf32>
    %8 = arith.addf %6, %7 : vector<16x128xf32>
    %9 = arith.mulf %2, %5 : vector<16x128xf32>
    %10 = arith.addf %8, %9 : vector<16x128xf32>
    %11 = arith.mulf %0, %0 : vector<16x128xf32>
    %12 = arith.mulf %1, %1 : vector<16x128xf32>
    %13 = arith.addf %11, %12 : vector<16x128xf32>
    %14 = arith.mulf %2, %2 : vector<16x128xf32>
    %15 = arith.addf %13, %14 : vector<16x128xf32>
    %16 = arith.mulf %3, %3 : vector<16x128xf32>
    %17 = arith.mulf %4, %4 : vector<16x128xf32>
    %18 = arith.addf %16, %17 : vector<16x128xf32>
    %19 = arith.mulf %5, %5 : vector<16x128xf32>
    %20 = arith.addf %18, %19 : vector<16x128xf32>
    %cst = arith.constant 9.99999982E-15 : f32
    %21 = vector.broadcast %cst : f32 to vector<16x128xf32>
    %22 = arith.maximumf %15, %21 : vector<16x128xf32>
    %cst_9 = arith.constant 9.99999982E-15 : f32
    %23 = vector.broadcast %cst_9 : f32 to vector<16x128xf32>
    %24 = arith.maximumf %20, %23 : vector<16x128xf32>
    %25 = arith.mulf %22, %24 : vector<16x128xf32>
    %26 = math.rsqrt %25 : vector<16x128xf32>
    %27 = arith.mulf %10, %26 : vector<16x128xf32>
    %cst_10 = arith.constant -0.99999988 : f32
    %cst_11 = arith.constant 0.99999988 : f32
    %28 = vector.broadcast %cst_10 : f32 to vector<16x128xf32>
    %29 = arith.maximumf %28, %27 : vector<16x128xf32>
    %30 = vector.broadcast %cst_11 : f32 to vector<16x128xf32>
    %31 = arith.minimumf %30, %29 : vector<16x128xf32>
    %32 = math.absf %31 : vector<16x128xf32>
    %cst_12 = arith.constant -0.0012624911 : f32
    %33 = vector.broadcast %cst_12 : f32 to vector<16x128xf32>
    %34 = arith.mulf %33, %32 : vector<16x128xf32>
    %cst_13 = arith.constant 6.670090e-03 : f32
    %35 = vector.broadcast %cst_13 : f32 to vector<16x128xf32>
    %36 = arith.addf %34, %35 : vector<16x128xf32>
    %37 = arith.mulf %36, %32 : vector<16x128xf32>
    %cst_14 = arith.constant -0.0170881264 : f32
    %38 = vector.broadcast %cst_14 : f32 to vector<16x128xf32>
    %39 = arith.addf %37, %38 : vector<16x128xf32>
    %40 = arith.mulf %39, %32 : vector<16x128xf32>
    %cst_15 = arith.constant 0.0308918804 : f32
    %41 = vector.broadcast %cst_15 : f32 to vector<16x128xf32>
    %42 = arith.addf %40, %41 : vector<16x128xf32>
    %43 = arith.mulf %42, %32 : vector<16x128xf32>
    %cst_16 = arith.constant -0.0501743034 : f32
    %44 = vector.broadcast %cst_16 : f32 to vector<16x128xf32>
    %45 = arith.addf %43, %44 : vector<16x128xf32>
    %46 = arith.mulf %45, %32 : vector<16x128xf32>
    %cst_17 = arith.constant 0.0889789909 : f32
    %47 = vector.broadcast %cst_17 : f32 to vector<16x128xf32>
    %48 = arith.addf %46, %47 : vector<16x128xf32>
    %49 = arith.mulf %48, %32 : vector<16x128xf32>
    %cst_18 = arith.constant -0.214598805 : f32
    %50 = vector.broadcast %cst_18 : f32 to vector<16x128xf32>
    %51 = arith.addf %49, %50 : vector<16x128xf32>
    %52 = arith.mulf %51, %32 : vector<16x128xf32>
    %cst_19 = arith.constant 1.57079625 : f32
    %53 = vector.broadcast %cst_19 : f32 to vector<16x128xf32>
    %54 = arith.addf %52, %53 : vector<16x128xf32>
    %cst_20 = arith.constant 1.000000e+00 : f32
    %55 = vector.broadcast %cst_20 : f32 to vector<16x128xf32>
    %56 = arith.subf %55, %32 : vector<16x128xf32>
    %cst_21 = arith.constant 0.000000e+00 : f32
    %57 = vector.broadcast %cst_21 : f32 to vector<16x128xf32>
    %58 = arith.maximumf %56, %57 : vector<16x128xf32>
    %59 = math.sqrt %58 : vector<16x128xf32>
    %60 = arith.mulf %59, %54 : vector<16x128xf32>
    %cst_22 = arith.constant 0.000000e+00 : f32
    %61 = vector.broadcast %cst_22 : f32 to vector<16x128xf32>
    %62 = arith.cmpf oge, %31, %61 : vector<16x128xf32>
    %cst_23 = arith.constant 3.14159274 : f32
    %63 = vector.broadcast %cst_23 : f32 to vector<16x128xf32>
    %64 = arith.subf %63, %60 : vector<16x128xf32>
    %65 = arith.select %62, %60, %64 : vector<16x128xi1>, vector<16x128xf32>
    %cst_24 = arith.constant 3.14159274 : f32
    %66 = vector.broadcast %cst_24 : f32 to vector<16x128xf32>
    %67 = arith.subf %66, %65 : vector<16x128xf32>
    %68 = arith.minimumf %65, %67 : vector<16x128xf32>
    %cst_25 = arith.constant 57.2957802 : f32
    %69 = vector.broadcast %cst_25 : f32 to vector<16x128xf32>
    %70 = arith.mulf %68, %69 : vector<16x128xf32>
    %71 = vector.extract_strided_slice %70 {offsets = [0, 0], sizes = [8, 128], strides = [1, 1]} : vector<16x128xf32> to vector<8x128xf32>
    %72 = vector.extract_strided_slice %70 {offsets = [8, 0], sizes = [8, 128], strides = [1, 1]} : vector<16x128xf32> to vector<8x128xf32>
    %73 = arith.maximumf %71, %72 : vector<8x128xf32>
    %74 = tpu.iota {dimensions = array<i32: 0>} : vector<8x1xi32>
    %c3_i32 = arith.constant 3 : i32
    %75 = vector.broadcast %c3_i32 : i32 to vector<8x1xi32>
    %76 = arith.andi %74, %75 : vector<8x1xi32>
    %c0_i32 = arith.constant 0 : i32
    %77 = vector.broadcast %c0_i32 : i32 to vector<8x1xi32>
    %78 = arith.cmpi eq, %76, %77 : vector<8x1xi32>
    %c1_i32 = arith.constant 1 : i32
    %79 = vector.broadcast %c1_i32 : i32 to vector<8x1xi32>
    %80 = arith.cmpi eq, %76, %79 : vector<8x1xi32>
    %c2_i32 = arith.constant 2 : i32
    %81 = vector.broadcast %c2_i32 : i32 to vector<8x1xi32>
    %82 = arith.cmpi eq, %76, %81 : vector<8x1xi32>
    %cst_26 = arith.constant -5.000000e+01 : f32
    %cst_27 = arith.constant -1.500000e+01 : f32
    %83 = vector.broadcast %cst_26 : f32 to vector<8x1xf32>
    %84 = vector.broadcast %cst_27 : f32 to vector<8x1xf32>
    %85 = arith.select %82, %83, %84 : vector<8x1xi1>, vector<8x1xf32>
    %cst_28 = arith.constant -1.000000e+01 : f32
    %86 = vector.broadcast %cst_28 : f32 to vector<8x1xf32>
    %87 = arith.select %80, %86, %85 : vector<8x1xi1>, vector<8x1xf32>
    %cst_29 = arith.constant -2.500000e+00 : f32
    %88 = vector.broadcast %cst_29 : f32 to vector<8x1xf32>
    %89 = arith.select %78, %88, %87 : vector<8x1xi1>, vector<8x1xf32>
    %c0_i32_30 = arith.constant 0 : i32
    %90 = vector.broadcast %c0_i32_30 : i32 to vector<8x1xi32>
    %91 = arith.cmpi eq, %76, %90 : vector<8x1xi32>
    %c1_i32_31 = arith.constant 1 : i32
    %92 = vector.broadcast %c1_i32_31 : i32 to vector<8x1xi32>
    %93 = arith.cmpi eq, %76, %92 : vector<8x1xi32>
    %c2_i32_32 = arith.constant 2 : i32
    %94 = vector.broadcast %c2_i32_32 : i32 to vector<8x1xi32>
    %95 = arith.cmpi eq, %76, %94 : vector<8x1xi32>
    %cst_33 = arith.constant -5.000000e-01 : f32
    %cst_34 = arith.constant 5.000000e-01 : f32
    %96 = vector.broadcast %cst_33 : f32 to vector<8x1xf32>
    %97 = vector.broadcast %cst_34 : f32 to vector<8x1xf32>
    %98 = arith.select %95, %96, %97 : vector<8x1xi1>, vector<8x1xf32>
    %cst_35 = arith.constant 5.000000e-01 : f32
    %99 = vector.broadcast %cst_35 : f32 to vector<8x1xf32>
    %100 = arith.select %93, %99, %98 : vector<8x1xi1>, vector<8x1xf32>
    %cst_36 = arith.constant 5.000000e-01 : f32
    %101 = vector.broadcast %cst_36 : f32 to vector<8x1xf32>
    %102 = arith.select %91, %101, %100 : vector<8x1xi1>, vector<8x1xf32>
    %c0_i32_37 = arith.constant 0 : i32
    %103 = vector.broadcast %c0_i32_37 : i32 to vector<8x1xi32>
    %104 = arith.cmpi eq, %76, %103 : vector<8x1xi32>
    %c1_i32_38 = arith.constant 1 : i32
    %105 = vector.broadcast %c1_i32_38 : i32 to vector<8x1xi32>
    %106 = arith.cmpi eq, %76, %105 : vector<8x1xi32>
    %c2_i32_39 = arith.constant 2 : i32
    %107 = vector.broadcast %c2_i32_39 : i32 to vector<8x1xi32>
    %108 = arith.cmpi eq, %76, %107 : vector<8x1xi32>
    %cst_40 = arith.constant 3.000000e+01 : f32
    %cst_41 = arith.constant -3.000000e+01 : f32
    %109 = vector.broadcast %cst_40 : f32 to vector<8x1xf32>
    %110 = vector.broadcast %cst_41 : f32 to vector<8x1xf32>
    %111 = arith.select %108, %109, %110 : vector<8x1xi1>, vector<8x1xf32>
    %cst_42 = arith.constant -2.250000e+01 : f32
    %112 = vector.broadcast %cst_42 : f32 to vector<8x1xf32>
    %113 = arith.select %106, %112, %111 : vector<8x1xi1>, vector<8x1xf32>
    %cst_43 = arith.constant -1.000000e+01 : f32
    %114 = vector.broadcast %cst_43 : f32 to vector<8x1xf32>
    %115 = arith.select %104, %114, %113 : vector<8x1xi1>, vector<8x1xf32>
    %c0_i32_44 = arith.constant 0 : i32
    %116 = vector.broadcast %c0_i32_44 : i32 to vector<8x1xi32>
    %117 = arith.cmpi eq, %76, %116 : vector<8x1xi32>
    %c1_i32_45 = arith.constant 1 : i32
    %118 = vector.broadcast %c1_i32_45 : i32 to vector<8x1xi32>
    %119 = arith.cmpi eq, %76, %118 : vector<8x1xi32>
    %c2_i32_46 = arith.constant 2 : i32
    %120 = vector.broadcast %c2_i32_46 : i32 to vector<8x1xi32>
    %121 = arith.cmpi eq, %76, %120 : vector<8x1xi32>
    %cst_47 = arith.constant 0.000000e+00 : f32
    %cst_48 = arith.constant 0.000000e+00 : f32
    %122 = vector.broadcast %cst_47 : f32 to vector<8x1xf32>
    %123 = vector.broadcast %cst_48 : f32 to vector<8x1xf32>
    %124 = arith.select %121, %122, %123 : vector<8x1xi1>, vector<8x1xf32>
    %cst_49 = arith.constant -4.500000e+01 : f32
    %125 = vector.broadcast %cst_49 : f32 to vector<8x1xf32>
    %126 = arith.select %119, %125, %124 : vector<8x1xi1>, vector<8x1xf32>
    %cst_50 = arith.constant -3.000000e+01 : f32
    %127 = vector.broadcast %cst_50 : f32 to vector<8x1xf32>
    %128 = arith.select %117, %127, %126 : vector<8x1xi1>, vector<8x1xf32>
    %c0_i32_51 = arith.constant 0 : i32
    %129 = vector.broadcast %c0_i32_51 : i32 to vector<8x1xi32>
    %130 = arith.cmpi eq, %76, %129 : vector<8x1xi32>
    %c1_i32_52 = arith.constant 1 : i32
    %131 = vector.broadcast %c1_i32_52 : i32 to vector<8x1xi32>
    %132 = arith.cmpi eq, %76, %131 : vector<8x1xi32>
    %c2_i32_53 = arith.constant 2 : i32
    %133 = vector.broadcast %c2_i32_53 : i32 to vector<8x1xi32>
    %134 = arith.cmpi eq, %76, %133 : vector<8x1xi32>
    %cst_54 = arith.constant 0.000000e+00 : f32
    %cst_55 = arith.constant 0.000000e+00 : f32
    %135 = vector.broadcast %cst_54 : f32 to vector<8x1xf32>
    %136 = vector.broadcast %cst_55 : f32 to vector<8x1xf32>
    %137 = arith.select %134, %135, %136 : vector<8x1xi1>, vector<8x1xf32>
    %cst_56 = arith.constant 5.000000e-01 : f32
    %138 = vector.broadcast %cst_56 : f32 to vector<8x1xf32>
    %139 = arith.select %132, %138, %137 : vector<8x1xi1>, vector<8x1xf32>
    %cst_57 = arith.constant 5.000000e-01 : f32
    %140 = vector.broadcast %cst_57 : f32 to vector<8x1xf32>
    %141 = arith.select %130, %140, %139 : vector<8x1xi1>, vector<8x1xf32>
    %cst_58 = arith.constant 5.000000e-01 : f32
    %142 = vector.broadcast %cst_58 : f32 to vector<8x128xf32>
    %143 = arith.mulf %142, %73 : vector<8x128xf32>
    %144 = vector.broadcast %89 : vector<8x1xf32> to vector<8x128xf32>
    %145 = arith.addf %143, %144 : vector<8x128xf32>
    %146 = math.tanh %145 : vector<8x128xf32>
    %cst_59 = arith.constant 5.000000e-01 : f32
    %147 = vector.broadcast %cst_59 : f32 to vector<8x128xf32>
    %148 = arith.mulf %147, %146 : vector<8x128xf32>
    %cst_60 = arith.constant 5.000000e-01 : f32
    %149 = vector.broadcast %cst_60 : f32 to vector<8x128xf32>
    %150 = arith.addf %148, %149 : vector<8x128xf32>
    %151 = vector.broadcast %102 : vector<8x1xf32> to vector<8x128xf32>
    %152 = arith.mulf %151, %73 : vector<8x128xf32>
    %153 = vector.broadcast %115 : vector<8x1xf32> to vector<8x128xf32>
    %154 = arith.addf %152, %153 : vector<8x128xf32>
    %155 = math.tanh %154 : vector<8x128xf32>
    %cst_61 = arith.constant 5.000000e-01 : f32
    %156 = vector.broadcast %cst_61 : f32 to vector<8x128xf32>
    %157 = arith.mulf %156, %155 : vector<8x128xf32>
    %158 = arith.addf %150, %157 : vector<8x128xf32>
    %cst_62 = arith.constant 5.000000e-01 : f32
    %159 = vector.broadcast %cst_62 : f32 to vector<8x128xf32>
    %160 = arith.addf %158, %159 : vector<8x128xf32>
    %cst_63 = arith.constant 5.000000e-01 : f32
    %161 = vector.broadcast %cst_63 : f32 to vector<8x128xf32>
    %162 = arith.mulf %161, %73 : vector<8x128xf32>
    %163 = vector.broadcast %128 : vector<8x1xf32> to vector<8x128xf32>
    %164 = arith.addf %162, %163 : vector<8x128xf32>
    %165 = math.tanh %164 : vector<8x128xf32>
    %166 = vector.broadcast %141 : vector<8x1xf32> to vector<8x128xf32>
    %167 = arith.mulf %166, %165 : vector<8x128xf32>
    %168 = arith.addf %160, %167 : vector<8x128xf32>
    %169 = vector.broadcast %141 : vector<8x1xf32> to vector<8x128xf32>
    %170 = arith.addf %168, %169 : vector<8x128xf32>
    %171 = tpu.iota {dimensions = array<i32: 0>} : vector<8x1xi32>
    %c4_i32 = arith.constant 4 : i32
    %172 = vector.broadcast %c4_i32 : i32 to vector<8x1xi32>
    %173 = arith.cmpi slt, %171, %172 : vector<8x1xi32>
    %174 = arith.extui %173 : vector<8x1xi1> to vector<8x1xi32>
    %175 = arith.sitofp %174 : vector<8x1xi32> to vector<8x1xf32>
    %176 = vector.broadcast %175 : vector<8x1xf32> to vector<8x128xf32>
    %177 = arith.mulf %170, %176 : vector<8x128xf32>
    %cst_64 = arith.constant dense<0.000000e+00> : vector<128xf32>
    %178 = vector.multi_reduction <add>, %177, %cst_64 [0] : vector<8x128xf32> to vector<128xf32>
    %179 = vector.shape_cast %178 : vector<128xf32> to vector<1x128xf32>
    %cst_65 = arith.constant 1.000000e+00 : f32
    %180 = vector.broadcast %cst_65 : f32 to vector<1x128xf32>
    %181 = arith.addf %180, %179 : vector<1x128xf32>
    %cst_66 = arith.constant 1.000000e+00 : f32
    %182 = vector.broadcast %cst_66 : f32 to vector<8x1xf32>
    %183 = arith.subf %182, %175 : vector<8x1xf32>
    %184 = vector.broadcast %183 : vector<8x1xf32> to vector<8x128xf32>
    %185 = arith.mulf %170, %184 : vector<8x128xf32>
    %cst_67 = arith.constant dense<0.000000e+00> : vector<128xf32>
    %186 = vector.multi_reduction <add>, %185, %cst_67 [0] : vector<8x128xf32> to vector<128xf32>
    %187 = vector.shape_cast %186 : vector<128xf32> to vector<1x128xf32>
    %cst_68 = arith.constant 1.000000e+00 : f32
    %188 = vector.broadcast %cst_68 : f32 to vector<1x128xf32>
    %189 = arith.addf %188, %187 : vector<1x128xf32>
    %c128_i32 = arith.constant 128 : i32
    %190 = arith.muli %arg0, %c128_i32 : i32
    %191 = tpu.iota {dimensions = array<i32: 1>} : vector<1x128xi32>
    %192 = vector.broadcast %190 : i32 to vector<1x128xi32>
    %193 = arith.addi %191, %192 : vector<1x128xi32>
    %c0_69 = arith.constant 0 : index
    %194 = memref.load %arg1[%c0_69] : memref<1xi32, #tpu.memory_space<smem>>
    %195 = vector.broadcast %194 : i32 to vector<1x128xi32>
    %196 = arith.cmpi slt, %193, %195 : vector<1x128xi32>
    %cst_70 = arith.constant 5.000000e-01 : f32
    %197 = vector.broadcast %cst_70 : f32 to vector<1x128xf32>
    %198 = arith.mulf %197, %189 : vector<1x128xf32>
    %199 = arith.subf %181, %198 : vector<1x128xf32>
    %cst_71 = arith.constant 0.000000e+00 : f32
    %200 = vector.broadcast %cst_71 : f32 to vector<1x128xf32>
    %201 = arith.cmpf oge, %199, %200 : vector<1x128xf32>
    %cst_72 = arith.constant 1.000000e-01 : f32
    %202 = vector.broadcast %cst_72 : f32 to vector<1x128xf32>
    %203 = arith.mulf %202, %199 : vector<1x128xf32>
    %204 = arith.select %201, %199, %203 : vector<1x128xi1>, vector<1x128xf32>
    %cst_73 = arith.constant 0.000000e+00 : f32
    %205 = vector.broadcast %cst_73 : f32 to vector<1x128xf32>
    %206 = arith.select %196, %204, %205 : vector<1x128xi1>, vector<1x128xf32>
    %cst_74 = arith.constant dense<0.000000e+00> : vector<1xf32>
    %207 = vector.multi_reduction <add>, %206, %cst_74 [1] : vector<1x128xf32> to vector<1xf32>
    %208 = vector.shape_cast %207 : vector<1xf32> to vector<1x1xf32>
    %cst_75 = arith.constant 0.000000e+00 : f32
    %209 = vector.broadcast %cst_75 : f32 to vector<1x128xf32>
    %210 = arith.select %196, %181, %209 : vector<1x128xi1>, vector<1x128xf32>
    %cst_76 = arith.constant dense<0.000000e+00> : vector<1xf32>
    %211 = vector.multi_reduction <add>, %210, %cst_76 [1] : vector<1x128xf32> to vector<1xf32>
    %212 = vector.shape_cast %211 : vector<1xf32> to vector<1x1xf32>
    %cst_77 = arith.constant -3.400000e+38 : f32
    %213 = vector.broadcast %cst_77 : f32 to vector<1x128xf32>
    %214 = arith.select %196, %181, %213 : vector<1x128xi1>, vector<1x128xf32>
    %cst_78 = arith.constant dense<0xFF800000> : vector<1xf32>
    %215 = vector.multi_reduction <maximumf>, %214, %cst_78 [1] : vector<1x128xf32> to vector<1xf32>
    %216 = vector.shape_cast %215 : vector<1xf32> to vector<1x1xf32>
    %217 = tpu.iota {dimensions = array<i32: 0>} : vector<8x128xi32>
    %218 = tpu.iota {dimensions = array<i32: 1>} : vector<8x128xi32>
    %c0_i32_79 = arith.constant 0 : i32
    %219 = vector.broadcast %c0_i32_79 : i32 to vector<8x128xi32>
    %220 = arith.cmpi eq, %217, %219 : vector<8x128xi32>
    %c0_i32_80 = arith.constant 0 : i32
    %221 = vector.broadcast %c0_i32_80 : i32 to vector<8x128xi32>
    %222 = arith.cmpi eq, %218, %221 : vector<8x128xi32>
    %223 = arith.andi %220, %222 : vector<8x128xi1>
    %cst_81 = arith.constant 0.000000e+00 : f32
    %224 = vector.broadcast %cst_81 : f32 to vector<8x128xf32>
    %225 = vector.shape_cast %208 : vector<1x1xf32> to vector<1x1xf32>
    %226 = vector.broadcast %225 : vector<1x1xf32> to vector<8x128xf32>
    %227 = arith.select %223, %226, %224 : vector<8x128xi1>, vector<8x128xf32>
    %c1_i32_82 = arith.constant 1 : i32
    %228 = vector.broadcast %c1_i32_82 : i32 to vector<8x128xi32>
    %229 = arith.cmpi eq, %217, %228 : vector<8x128xi32>
    %c0_i32_83 = arith.constant 0 : i32
    %230 = vector.broadcast %c0_i32_83 : i32 to vector<8x128xi32>
    %231 = arith.cmpi eq, %218, %230 : vector<8x128xi32>
    %232 = arith.andi %229, %231 : vector<8x128xi1>
    %233 = vector.shape_cast %212 : vector<1x1xf32> to vector<1x1xf32>
    %234 = vector.broadcast %233 : vector<1x1xf32> to vector<8x128xf32>
    %235 = arith.select %232, %234, %227 : vector<8x128xi1>, vector<8x128xf32>
    %c2_i32_84 = arith.constant 2 : i32
    %236 = vector.broadcast %c2_i32_84 : i32 to vector<8x128xi32>
    %237 = arith.cmpi eq, %217, %236 : vector<8x128xi32>
    %c0_i32_85 = arith.constant 0 : i32
    %238 = vector.broadcast %c0_i32_85 : i32 to vector<8x128xi32>
    %239 = arith.cmpi eq, %218, %238 : vector<8x128xi32>
    %240 = arith.andi %237, %239 : vector<8x128xi1>
    %241 = vector.shape_cast %216 : vector<1x1xf32> to vector<1x1xf32>
    %242 = vector.broadcast %241 : vector<1x1xf32> to vector<8x128xf32>
    %243 = arith.select %240, %242, %235 : vector<8x128xi1>, vector<8x128xf32>
    %c0_86 = arith.constant 0 : index
    %c0_87 = arith.constant 0 : index
    %244 = vector.load %arg4[%c0_86, %c0_87] : memref<8x128xf32, #tpu.memory_space<vmem>>, vector<8x128xf32>
    tpu.vector_store %arg4[%c0_86, %c0_87], %243 {strides = array<i32>} : memref<8x128xf32, #tpu.memory_space<vmem>>, vector<8x128xf32>,
    return
  }
  func.func @transform_0(%arg0: i32) -> i32 {
    %c0_i32 = arith.constant 0 : i32
    %c0_i32_0 = arith.constant 0 : i32
    return %c0_i32 : i32
  }
  func.func @transform_1(%arg0: i32) -> (i32, i32) {
    %c0_i32 = arith.constant 0 : i32
    %c0_i32_0 = arith.constant 0 : i32
    return %c0_i32, %arg0 : i32, i32
  }
  func.func @transform_2(%arg0: i32) -> (i32, i32) {
    %c0_i32 = arith.constant 0 : i32
    %c0_i32_0 = arith.constant 0 : i32
    return %c0_i32, %arg0 : i32, i32
  }
  func.func @transform_3(%arg0: i32) -> (i32, i32) {
    %c0_i32 = arith.constant 0 : i32
    %c0_i32_0 = arith.constant 0 : i32
    return %arg0, %c0_i32 : i32, i32
  }
}

</mosaic_0001>

<llo_original>
// kernel: ergo_loss.1
$region0: #{ergo_loss.1}
  #allocation0 [shape = 'u32[]', space=smem, size = 0x4, offset = 0x4, fixed_abs, tag = 'smem constant byte address 0x4 - core index']
  #allocation1 [shape = 'u32[72,128]{1,0:T(1,128)}', space=vmem, size = 0x9000, scoped, tag = 'internal scratch']
  #allocation2 [shape = 's32[1]{0:T(128)S(6)}', space=smem, size = 0x200, scoped, tag = 'scoped memory for ergo_loss.1']
  %s0 = inlined_call_operand.<no memory space> [shape: s32[1], index: 0, kind: input, shape index: {}]
  %s1 = inlined_call_operand.vmem [shape: f32[48,128], index: 1, kind: input, shape index: {}]
  %s2 = inlined_call_operand.vmem [shape: f32[48,128], index: 2, kind: input, shape index: {}]
  %s3 = inlined_call_operand.vmem [shape: f32[8,128], index: 3, kind: output, shape index: {}]
  %s4 = sld [smem:[#allocation0]]
  $region22: #{ergo_loss.1} parent=0
    _
  %s6 = ssub.s32 1, %s4
  %s7 = scalar_select 0, %s6, %s4
  %8 = sst [smem:[#allocation2]] %s0
  // Predicated region
  $region2: #{ergo_loss.1} parent=0 // pred_check
    _
  $region3: #{ergo_loss.1} parent=0 // pred_check_branch
    %10 = sbr.rel (0) target = $region5
  $region4: #{ergo_loss.1} parent=0 // pred_region
    _
  $region5: #{ergo_loss.1} parent=0 // pred_fallthru
    _
  // Predicated region
  $region6: #{ergo_loss.1} parent=0 // pred_check
    _
  $region7: #{ergo_loss.1} parent=0 // pred_check_branch
    %12 = sbr.rel (0) target = $region9
  $region8: #{ergo_loss.1} parent=0 // pred_region
    _
  $region9: #{ergo_loss.1} parent=0 // pred_fallthru
    _
  // Predicated region
  $region10: #{ergo_loss.1} parent=0 // pred_check
    _
  $region11: #{ergo_loss.1} parent=0 // pred_check_branch
    %14 = sbr.rel (0) target = $region13
  $region12: #{ergo_loss.1} parent=0 // pred_region
    _
  $region13: #{ergo_loss.1} parent=0 // pred_fallthru
    _
  %v15 = vld [vmem:[%s1] sm:$0xff]
  %v16 = vld [vmem:[%s1 + $0x8] sm:$0xff]
  %v17 = vld [vmem:[%s1 + $0x10] sm:$0xff]
  %v18 = vld [vmem:[%s1 + $0x18] sm:$0xff]
  %v19 = vld [vmem:[%s1 + $0x20] sm:$0xff]
  %v20 = vld [vmem:[%s1 + $0x28] sm:$0xff]
  %v21 = vld [vmem:[%s2] sm:$0xff]
  %v22 = vld [vmem:[%s2 + $0x8] sm:$0xff]
  %v23 = vld [vmem:[%s2 + $0x10] sm:$0xff]
  %v24 = vld [vmem:[%s2 + $0x18] sm:$0xff]
  %v25 = vld [vmem:[%s2 + $0x20] sm:$0xff]
  %v26 = vld [vmem:[%s2 + $0x28] sm:$0xff]
  %v27 = vmul.f32 %v15, %v21
  %v28 = vmul.f32 %v16, %v22
  %v29 = vmul.f32 %v17, %v23
  %v30 = vmul.f32 %v18, %v24
  %v31 = vadd.f32 %v27, %v29
  %v32 = vadd.f32 %v28, %v30
  %v33 = vmul.f32 %v19, %v25
  %v34 = vmul.f32 %v20, %v26
  %v35 = vadd.f32 %v31, %v33
  %v36 = vadd.f32 %v32, %v34
  %v37 = vmul.f32 %v15, %v15
  %v38 = vmul.f32 %v16, %v16
  %v39 = vmul.f32 %v17, %v17
  %v40 = vmul.f32 %v18, %v18
  %v41 = vadd.f32 %v37, %v39
  %v42 = vadd.f32 %v38, %v40
  %v43 = vmul.f32 %v19, %v19
  %v44 = vmul.f32 %v20, %v20
  %v45 = vadd.f32 %v41, %v43
  %v46 = vadd.f32 %v42, %v44
  %v47 = vmul.f32 %v21, %v21
  %v48 = vmul.f32 %v22, %v22
  %v49 = vmul.f32 %v23, %v23
  %v50 = vmul.f32 %v24, %v24
  %v51 = vadd.f32 %v47, %v49
  %v52 = vadd.f32 %v48, %v50
  %v53 = vmul.f32 %v25, %v25
  %v54 = vmul.f32 %v26, %v26
  %v55 = vadd.f32 %v51, %v53
  %v56 = vadd.f32 %v52, %v54
  %v57 = vmax.f32 %v45, 1e-14
  %v58 = vmax.f32 %v46, 1e-14
  %v59 = vmax.f32 %v55, 1e-14
  %v60 = vmax.f32 %v56, 1e-14
  %v61 = vmul.f32 %v57, %v59
  %v62 = vmul.f32 %v58, %v60
  %v63 = vrsqrt.pop %v61
  %v64 = vmul.f32 %v63, %v61
  %v65 = vmul.f32 %v64, %v63
  %v66 = vmul.f32 0.5, %v65
  %v67 = vsub.f32 1.5, %v66
  %v68 = vmul.f32 %v63, %v67
  %vm69 = vweird.f32 %v61
  %vm70 = vweird.f32 %v63
  %vm71 = vmor %vm69, %vm70
  %v72 = vsel %vm71, %v63, %v68
  %v73 = vrsqrt.pop %v62
  %v74 = vmul.f32 %v73, %v62
  %v75 = vmul.f32 %v74, %v73
  %v76 = vmul.f32 0.5, %v75
  %v77 = vsub.f32 1.5, %v76
  %v78 = vmul.f32 %v73, %v77
  %vm79 = vweird.f32 %v62
  %vm80 = vweird.f32 %v73
  %vm81 = vmor %vm79, %vm80
  %v82 = vsel %vm81, %v73, %v78
  %v83 = vmul.f32 %v35, %v72
  %v84 = vmul.f32 %v36, %v82
  %v85 = vmax.f32 %v83, -0.9999999
  %v86 = vmax.f32 %v84, -0.9999999
  %v87 = vmin.f32 %v85, 0.9999999
  %v88 = vmin.f32 %v86, 0.9999999
  %v89 = vand.u32 2147483647, %v87
  %v90 = vand.u32 2147483647, %v88
  %v91 = vmul.f32 %v89, -0.0012624911
  %v92 = vmul.f32 %v90, -0.0012624911
  %v93 = vadd.f32 %v91, 0.00667009
  %v94 = vadd.f32 %v92, 0.00667009
  %v95 = vmul.f32 %v93, %v89
  %v96 = vmul.f32 %v94, %v90
  %v97 = vadd.f32 %v95, -0.017088126
  %v98 = vadd.f32 %v96, -0.017088126
  %v99 = vmul.f32 %v97, %v89
  %v100 = vmul.f32 %v98, %v90
  %v101 = vadd.f32 %v99, 0.03089188
  %v102 = vadd.f32 %v100, 0.03089188
  %v103 = vmul.f32 %v101, %v89
  %v104 = vmul.f32 %v102, %v90
  %v105 = vadd.f32 %v103, -0.050174303
  %v106 = vadd.f32 %v104, -0.050174303
  %v107 = vmul.f32 %v105, %v89
  %v108 = vmul.f32 %v106, %v90
  %v109 = vadd.f32 %v107, 0.08897899
  %v110 = vadd.f32 %v108, 0.08897899
  %v111 = vmul.f32 %v109, %v89
  %v112 = vmul.f32 %v110, %v90
  %v113 = vadd.f32 %v111, -0.2145988
  %v114 = vadd.f32 %v112, -0.2145988
  %v115 = vmul.f32 %v113, %v89
  %v116 = vmul.f32 %v114, %v90
  %v117 = vadd.f32 %v115, 1.5707963
  %v118 = vadd.f32 %v116, 1.5707963
  %v119 = vsub.f32 1.0, %v89
  %v120 = vsub.f32 1.0, %v90
  %v121 = vmax.f32 %v119, 0.0
  %v122 = vmax.f32 %v120, 0.0
  %v123 = vrsqrt.pop %v121
  %v124 = vmul.f32 %v123, %v121
  %v125 = vmul.f32 %v124, %v123
  %v126 = vmul.f32 0.5, %v125
  %v127 = vsub.f32 1.5, %v126
  %v128 = vmul.f32 %v123, %v127
  %v129 = vmul.f32 %v121, %v128
  %vm130 = vcmp.eq.f32.partialorder %v121, inf
  %v131 = vsel %vm130, %v121, %v129
  %vm132 = vcmp.eq.f32.partialorder %v121, 0.0
  %v133 = vand.u32 %v121, 2147483648
  %v134 = vsel %vm132, %v133, %v131
  %v135 = vrsqrt.pop %v122
  %v136 = vmul.f32 %v135, %v122
  %v137 = vmul.f32 %v136, %v135
  %v138 = vmul.f32 0.5, %v137
  %v139 = vsub.f32 1.5, %v138
  %v140 = vmul.f32 %v135, %v139
  %v141 = vmul.f32 %v122, %v140
  %vm142 = vcmp.eq.f32.partialorder %v122, inf
  %v143 = vsel %vm142, %v122, %v141
  %vm144 = vcmp.eq.f32.partialorder %v122, 0.0
  %v145 = vand.u32 %v122, 2147483648
  %v146 = vsel %vm144, %v145, %v143
  %v147 = vmul.f32 %v134, %v117
  %v148 = vmul.f32 %v146, %v118
  %vm149 = vcmp.ge.f32.partialorder %v87, 0.0
  %vm150 = vcmp.ge.f32.partialorder %v88, 0.0
  %v151 = vsub.f32 3.1415927, %v147
  %v152 = vsub.f32 3.1415927, %v148
  %v153 = vsel %vm149, %v147, %v151
  %v154 = vsel %vm150, %v148, %v152
  %v155 = vsub.f32 3.1415927, %v153
  %v156 = vsub.f32 3.1415927, %v154
  %v157 = vmin.f32 %v153, %v155
  %v158 = vmin.f32 %v154, %v156
  %v159 = vmul.f32 %v157, 57.29578
  %v160 = vmul.f32 %v158, 57.29578
  %v161 = vmax.f32 %v159, %v160
  %v162 = vlaneseq
  %v163 = vshrl.u32 %v162, 7
  %v164 = vand.u32 %v163, 3
  %vm165 = vcmp.eq.s32.totalorder %v164, 0
  %vm166 = vcmp.eq.s32.totalorder %v164, 1
  %vm167 = vcmp.eq.s32.totalorder %v164, 2
  %v168 = vsel %vm167, -50.0, -15.0
  %v169 = vsel %vm166, -10.0, %v168
  %v170 = vsel %vm165, -2.5, %v169
  %v171 = vsel %vm167, -0.5, 0.5
  %v172 = vsel %vm166, 0.5, %v171
  %v173 = vsel %vm165, 0.5, %v172
  %v174 = vsel %vm167, 30.0, -30.0
  %v175 = vsel %vm166, -22.5, %v174
  %v176 = vsel %vm165, -10.0, %v175
  %v177 = vsel %vm166, -45.0, 0.0
  %v178 = vsel %vm165, -30.0, %v177
  %v179 = vsel %vm166, 0.5, 0.0
  %v180 = vsel %vm165, 0.5, %v179
  %v181 = vmul.f32 %v161, 0.5
  %v182 = vadd.f32 %v181, %v170
  %v183 = vtanh.pop %v182
  %v184 = vmul.f32 %v183, 0.5
  %v185 = vadd.f32 %v184, 0.5
  %v186 = vmul.f32 %v173, %v161
  %v187 = vadd.f32 %v186, %v176
  %v188 = vtanh.pop %v187
  %v189 = vmul.f32 %v188, 0.5
  %v190 = vadd.f32 %v185, %v189
  %v191 = vadd.f32 %v190, 0.5
  %v192 = vadd.f32 %v181, %v178
  %v193 = vtanh.pop %v192
  %v194 = vmul.f32 %v180, %v193
  %v195 = vadd.f32 %v191, %v194
  %v196 = vadd.f32 %v195, %v180
  %vm197 = vcmp.lt.s32.totalorder %v163, 4
  %v198 = vsel %vm197, 1, 0
  %v199 = vcvt.s32.f32 %v198
  %v200 = vmul.f32 %v196, %v199
  %v201 = vrot.slane %v200, 4
  %v202 = vadd.f32 %v200, %v201
  %v203 = vrot.slane %v202, 2
  %v204 = vadd.f32 %v202, %v203
  %v205 = vrot.slane %v204, 1
  %v206 = vadd.f32 %v204, %v205
  %v207 = vadd.f32 %v206, 1.0
  %v208 = vsub.f32 1.0, %v199
  %v209 = vmul.f32 %v196, %v208
  %v210 = vrot.slane %v209, 4
  %v211 = vadd.f32 %v209, %v210
  %v212 = vrot.slane %v211, 2
  %v213 = vadd.f32 %v211, %v212
  %v214 = vrot.slane %v213, 1
  %v215 = vadd.f32 %v213, %v214
  %v216 = vadd.f32 %v215, 1.0
  %s217 = smul.u32 0, 128
  %v218 = vlaneseq
  %v219 = vand.u32 %v218, 127
  %v220 = vstv %s217
  %v221 = vadd.s32 %v219, %v220
  %s222 = sld [smem:[#allocation2]]
  %v223 = vstv %s222
  %vm224 = vcmp.lt.s32.totalorder %v221, %v223
  %v225 = vmul.f32 %v216, 0.5
  %v226 = vsub.f32 %v207, %v225
  %vm227 = vcmp.ge.f32.partialorder %v226, 0.0
  %v228 = vmul.f32 %v226, 0.1
  %v229 = vsel %vm227, %v226, %v228
  %v230 = vsel %vm224, %v229, 0.0
  %231 = vadd.xlane.f32.xlu0 %v230
  %v232 = vpop.xlane.xlu0 %231
  %v233 = vsel %vm224, %v207, 0.0
  %234 = vadd.xlane.f32.xlu0 %v233
  %v235 = vpop.xlane.xlu0 %234
  %v236 = vsel %vm224, %v207, -3.4e+38
  %237 = vmax.xlane.f32.xlu0 %v236
  %v238 = vpop.xlane.xlu0 %237
  %vm239 = vcmp.eq.s32.totalorder %v163, 0
  %vm240 = vcmp.eq.s32.totalorder %v219, 0
  %vm241 = vmand %vm239, %vm240
  %v242 = vsel %vm241, %v232, 0.0
  %vm243 = vcmp.eq.s32.totalorder %v163, 1
  %vm244 = vmand %vm243, %vm240
  %v245 = vsel %vm244, %v235, %v242
  %vm246 = vcmp.eq.s32.totalorder %v163, 2
  %vm247 = vmand %vm246, %vm240
  %v248 = vsel %vm247, %v238, %v245
  %249 = vst [vmem:[%s3] sm:$0xff] %v248
  // Predicated region
  $region14: #{ergo_loss.1} parent=0 // pred_check
    _
  $region15: #{ergo_loss.1} parent=0 // pred_check_branch
    %251 = sbr.rel (0) target = $region17
  $region16: #{ergo_loss.1} parent=0 // pred_region
    _
  $region17: #{ergo_loss.1} parent=0 // pred_fallthru
    _
  // Predicated region
  $region18: #{ergo_loss.1} parent=0 // pred_check
    _
  $region19: #{ergo_loss.1} parent=0 // pred_check_branch
    %253 = sbr.rel (0) target = $region21
  $region20: #{ergo_loss.1} parent=0 // pred_region
    _
  $region21: #{ergo_loss.1} parent=0 // pred_fallthru
    _

</llo_original>
